<compile_context>
chip_gen: v7x
topology: tpu7x:2x2x1
jax: 0.10.0
libtpu: 0.0.40
codegen_flags: <defaults>
</compile_context>

<pallas_src>
import math

import jax
import jax.numpy as jnp
from jax.experimental import pallas as pl
from jax.experimental.pallas import tpu as pltpu


def _identity_kernel(x_ref, o_ref):
    # Elementwise pass-through on the current VMEM tile.
    o_ref[...] = x_ref[...]


# ~2 MiB per tile: with double buffering of input and output (4x tile bytes)
# this stays under v5e's 16 MiB default scoped VMEM and well under v6e/v7x.
_TARGET_TILE_BYTES = 2 * 1024 * 1024
_LANE = 128


def _pallas_identity_2d(x2d: jax.Array) -> jax.Array:
    """Lane-dense, large-tile identity copy with in-place output aliasing."""
    rows, lanes = x2d.shape
    itemsize = jnp.dtype(x2d.dtype).itemsize

    # Biggest row-block near the 2 MiB target, multiple of 32 sublanes so the
    # same tiling is (8,128)-legal for f32 (8), bf16 (16) and int8 (32) packing.
    target_rows = max(32, (_TARGET_TILE_BYTES // (lanes * itemsize)) // 32 * 32)
    block_rows = rows if rows <= target_rows else target_rows

    grid = (pl.cdiv(rows, block_rows),)

    return pl.pallas_call(
        _identity_kernel,
        out_shape=jax.ShapeDtypeStruct((rows, lanes), x2d.dtype),
        grid=grid,
        in_specs=[pl.BlockSpec((block_rows, lanes), lambda i: (i, 0))],
        out_specs=pl.BlockSpec((block_rows, lanes), lambda i: (i, 0)),
        # Identity op: let the output reuse the input buffer (no extra HBM
        # allocation for the result when XLA can donate it).
        input_output_aliases={0: 0},
        compiler_params=pltpu.CompilerParams(
            dimension_semantics=("parallel",),  # megacore sharding on v7x
            vmem_limit_bytes=16 * 1024 * 1024,  # 4x tile bytes + headroom
        ),
    )(x2d)


@jax.jit
def base_model_forward(x: jax.Array) -> jax.Array:
    """Identity forward pass for the abstract BaseModel.

    x: any-shaped array (e.g. NCHW (N, C, H, W), matching PyTorch convention).
    Returns an array with identical shape/dtype/values.
    """
    total = math.prod(x.shape)

    # Pick the widest lane dimension (multiple of 128) that divides the
    # element count, preferring wider slabs for fewer, denser rows.
    lanes = None
    for cand in (1024, 512, 256, _LANE):
        if total % cand == 0:
            lanes = cand
            break

    if lanes is None or total == 0:
        # TODO(synk): element counts not divisible by 128 (or empty tensors)
        # take the kernel-free identity path — BaseModel.forward defines no
        # computation anyway, so padding round-trips would only add HBM traffic.
        return x

    x2d = x.reshape(total // lanes, lanes)
    out2d = _pallas_identity_2d(x2d)
    return out2d.reshape(x.shape)


if __name__ == "__main__":
    key = jax.random.PRNGKey(0)
    # Small NCHW input consistent with a typical vision-model forward.
    x = jax.random.normal(key, (2, 4, 16, 16), dtype=jnp.float32)

    y = base_model_forward(x)
    y = jax.block_until_ready(y)

    # Identity semantics check (the only defined semantics of BaseModel).
    assert y.shape == x.shape and y.dtype == x.dtype
    assert bool(jnp.allclose(y, x))

    print("KERNEL_OK")
</pallas_src>

<mosaic_0001>
module attributes {stable_mosaic.version = 11 : i64} {
  func.func @_identity_kernel(%arg0: i32, %arg1: memref<2x1024xf32, #tpu.memory_space<vmem>>, %arg2: memref<2x1024xf32, #tpu.memory_space<vmem>>) attributes {dimension_semantics = [#tpu.dimension_semantics<parallel>], iteration_bounds = array<i64: 1>, scalar_prefetch = 0 : i64, scratch_operands = 0 : i64, tpu.core_type = #tpu.core_type<tc>, window_params = [{transform_indices = @transform_0, window_bounds = array<i64: 2, 1024>}, {transform_indices = @transform_1, window_bounds = array<i64: 2, 1024>}]} {
    %c0 = arith.constant 0 : index
    %c0_0 = arith.constant 0 : index
    %0 = vector.load %arg1[%c0, %c0_0] : memref<2x1024xf32, #tpu.memory_space<vmem>>, vector<2x1024xf32>
    %c0_1 = arith.constant 0 : index
    %c0_2 = arith.constant 0 : index
    %1 = vector.load %arg2[%c0_1, %c0_2] : memref<2x1024xf32, #tpu.memory_space<vmem>>, vector<2x1024xf32>
    tpu.vector_store %arg2[%c0_1, %c0_2], %0 {strides = array<i32>} : memref<2x1024xf32, #tpu.memory_space<vmem>>, vector<2x1024xf32>,
    return
  }
  func.func @transform_0(%arg0: i32) -> (i32, i32) {
    %c0_i32 = arith.constant 0 : i32
    %c0_i32_0 = arith.constant 0 : i32
    return %arg0, %c0_i32 : i32, i32
  }
  func.func @transform_1(%arg0: i32) -> (i32, i32) {
    %c0_i32 = arith.constant 0 : i32
    %c0_i32_0 = arith.constant 0 : i32
    return %arg0, %c0_i32 : i32, i32
  }
}

</mosaic_0001>

<llo_original>
// kernel: base_model_forward.1
$region0: #{base_model_forward.1}
  #allocation0 [shape = 'u32[]', space=smem, size = 0x4, offset = 0x4, fixed_abs, tag = 'smem constant byte address 0x4 - core index']
  #allocation1 [shape = 'u32[144,128]{1,0:T(1,128)}', space=vmem, size = 0x12000, scoped, tag = 'internal scratch']
  %s0 = inlined_call_operand.vmem [shape: f32[2,1024], index: 0, kind: input, shape index: {}, may-alias: {0,1}]
  %s1 = inlined_call_operand.vmem [shape: f32[2,1024], index: 1, kind: output, shape index: {}, may-alias: {0,1}]
  %s2 = sld [smem:[#allocation0]]
  $region14: #{base_model_forward.1} parent=0
    _
  %s4 = ssub.s32 1, %s2
  %s5 = scalar_select 0, %s4, %s2
  // Predicated region
  $region2: #{base_model_forward.1} parent=0 // pred_check
    _
  $region3: #{base_model_forward.1} parent=0 // pred_check_branch
    %7 = sbr.rel (0) target = $region5
  $region4: #{base_model_forward.1} parent=0 // pred_region
    _
  $region5: #{base_model_forward.1} parent=0 // pred_fallthru
    _
  %v8 = vld [vmem:[%s0] sm:$0xff]
  %v9 = vld [vmem:[%s0 + $0x8] sm:$0xff]
  %10 = vst [vmem:[%s1] sm:$0xff] %v8
  %11 = vst [vmem:[%s1 + $0x8] sm:$0xff] %v9
  // Predicated region
  $region6: #{base_model_forward.1} parent=0 // pred_check
    _
  $region7: #{base_model_forward.1} parent=0 // pred_check_branch
    %13 = sbr.rel (0) target = $region9
  $region8: #{base_model_forward.1} parent=0 // pred_region
    _
  $region9: #{base_model_forward.1} parent=0 // pred_fallthru
    _
  // Predicated region
  $region10: #{base_model_forward.1} parent=0 // pred_check
    _
  $region11: #{base_model_forward.1} parent=0 // pred_check_branch
    %15 = sbr.rel (0) target = $region13
  $region12: #{base_model_forward.1} parent=0 // pred_region
    _
  $region13: #{base_model_forward.1} parent=0 // pred_fallthru
    _

</llo_original>
